<compile_context>
chip_gen: v7x
topology: tpu7x:2x2x1
jax: 0.10.0
libtpu: 0.0.40
codegen_flags: <defaults>
</compile_context>

<pallas_src>
import numpy as np
import jax
import jax.numpy as jnp
from jax.experimental import pallas as pl
from jax.experimental.pallas import tpu as pltpu

_LANE = 512            # lane-dense output width (multiple of 128)
_MAX_TILE_ROWS = 1024  # 1024 * 512 * 4B = 2 MiB per f32 buffer


def _scale_kernel(std_ref, w_ref, o_ref):
    # std_ref: (1,) scalar-prefetch ref in SMEM; w_ref/o_ref: (tm, _LANE) VMEM.
    # Fused cast to o_ref.dtype halves write traffic when out_dtype is narrower.
    o_ref[...] = (w_ref[...] * std_ref[0]).astype(o_ref.dtype)


def scale_weight_pallas(weight: jax.Array, std, *, out_dtype=None) -> jax.Array:
    """Compute weight * std on TPU via a Pallas kernel.

    Works for arbitrary weight shapes: the tensor is flattened to a lane-dense
    (rows, 512) slab (padded once), scaled in large tiles, and reshaped back.
    """
    if out_dtype is None:
        out_dtype = weight.dtype
    orig_shape = weight.shape
    total = int(np.prod(orig_shape))

    # Lane-dense 2D slab; sublane dim a multiple of 8.
    rows = -(-total // _LANE)
    rows = ((rows + 7) // 8) * 8
    # Whole slab in one block when small; else big fixed row tile.
    tm = min(rows, _MAX_TILE_ROWS)
    rows = ((rows + tm - 1) // tm) * tm          # rows % tm == 0
    padded = rows * _LANE

    flat = weight.reshape(-1)
    if padded != total:
        flat = jnp.pad(flat, (0, padded - total))
    w2d = flat.reshape(rows, _LANE)

    std_arr = jnp.asarray(std, dtype=jnp.float32).reshape(1)

    out2d = pl.pallas_call(
        _scale_kernel,
        out_shape=jax.ShapeDtypeStruct((rows, _LANE), out_dtype),
        grid_spec=pltpu.PrefetchScalarGridSpec(
            num_scalar_prefetch=1,                       # std lands in SMEM
            grid=(rows // tm,),
            in_specs=[pl.BlockSpec((tm, _LANE), lambda i, std: (i, 0))],
            out_specs=pl.BlockSpec((tm, _LANE), lambda i, std: (i, 0)),
        ),
        compiler_params=pltpu.CompilerParams(
            # Parallel row-tile axis: no-op on v5e/v6e (1 TC), 2x DMA streams
            # on v7x (2 TCs per chip).
            dimension_semantics=("parallel",),
        ),
    )(std_arr, w2d)

    return out2d.reshape(-1)[:total].reshape(orig_shape)


class MiniContainerJAX:
    """JAX/Pallas port of Mini_Container."""

    def __init__(self, shape, bias=False, bias_init=0.0, gain=2.0,
                 use_wscale=False, fan_in=None, key=None):
        self.shape = tuple(shape)
        self.use_wscale = use_wscale
        if fan_in is None:
            fan_in = int(np.prod(shape[1:]))
        self.std = jnp.asarray(np.sqrt(gain / fan_in), dtype=jnp.float32)
        if key is None:
            key = jax.random.PRNGKey(0)
        # Deterministic normal(0, 1) init (matches torch.randn / .normal_(0,1)).
        self.weight = jax.random.normal(key, self.shape, dtype=jnp.float32)
        if bias:
            self.bias = jnp.full((self.shape[0],), bias_init, dtype=jnp.float32)
        else:
            self.bias = None

    def get_weight(self):
        # Mirrors PyTorch: returns (weight, std) unmultiplied.
        if self.use_wscale:
            return (self.weight, self.std)
        return (self.weight, 1.0)

    def get_scaled_weight(self, out_dtype=None):
        """Numeric hot path: weight * std via the Pallas kernel.

        NOTE: in a real model this scale should be folded into the consumer
        (scale the conv/matmul output) rather than materialized; this kernel
        exists to exercise the standalone path and optionally fuses the
        consumer's dtype cast to halve write traffic.
        """
        if not self.use_wscale:
            # Skip the kernel: no multiply-by-1.0 HBM pass.
            w = self.weight
            return w.astype(out_dtype) if out_dtype is not None else w
        return scale_weight_pallas(self.weight, self.std, out_dtype=out_dtype)

    def get_bias(self):
        return self.bias

    def forward(self):
        # TODO(synk): PyTorch forward() performs no tensor computation and
        # simply returns True; reproduced verbatim.
        return True


if __name__ == "__main__":
    key = jax.random.PRNGKey(0)

    # Conv-style weight whose fan_in (3*5*5=75) is NOT a multiple of 128,
    # exercising the padded lane-dense path.
    shape = (16, 3, 5, 5)
    mod = MiniContainerJAX(shape, bias=True, bias_init=0.0, gain=2.0,
                           use_wscale=True, key=key)

    # Forward semantics (returns True, no compute).
    assert mod.forward() is True

    # 1) wscale path: Pallas kernel, f32 output.
    scaled = jax.block_until_ready(mod.get_scaled_weight())
    ref = mod.weight * mod.std
    np.testing.assert_allclose(np.asarray(scaled), np.asarray(ref),
                               rtol=1e-6, atol=1e-6)

    # 2) Fused-cast path: f32 weight scaled and written as bf16 in one pass.
    scaled_bf16 = jax.block_until_ready(mod.get_scaled_weight(out_dtype=jnp.bfloat16))
    assert scaled_bf16.dtype == jnp.bfloat16
    np.testing.assert_allclose(np.asarray(scaled_bf16, dtype=np.float32),
                               np.asarray(ref), rtol=1e-2, atol=1e-2)

    # 3) use_wscale=False: no kernel launch, weight returned as-is.
    mod_plain = MiniContainerJAX(shape, use_wscale=False, key=key)
    w_plain = jax.block_until_ready(mod_plain.get_scaled_weight())
    np.testing.assert_allclose(np.asarray(w_plain), np.asarray(mod_plain.weight))

    # Bias is just a constant fill, verified in plain JAX.
    assert mod.get_bias().shape == (shape[0],)

    print("KERNEL_OK")
</pallas_src>

<mosaic_0001>
module attributes {stable_mosaic.version = 11 : i64} {
  func.func @_scale_kernel(%arg0: i32, %arg1: memref<1xf32, #tpu.memory_space<smem>>, %arg2: memref<8x512xf32, #tpu.memory_space<vmem>>, %arg3: memref<8x512xf32, #tpu.memory_space<vmem>>) attributes {dimension_semantics = [#tpu.dimension_semantics<parallel>], iteration_bounds = array<i64: 1>, scalar_prefetch = 1 : i64, scratch_operands = 0 : i64, tpu.core_type = #tpu.core_type<tc>, window_params = [{transform_indices = @transform_0, window_bounds = array<i64: 8, 512>}, {transform_indices = @transform_1, window_bounds = array<i64: 8, 512>}]} {
    %c0 = arith.constant 0 : index
    %c0_0 = arith.constant 0 : index
    %0 = vector.load %arg2[%c0, %c0_0] : memref<8x512xf32, #tpu.memory_space<vmem>>, vector<8x512xf32>
    %c0_1 = arith.constant 0 : index
    %1 = memref.load %arg1[%c0_1] : memref<1xf32, #tpu.memory_space<smem>>
    %2 = vector.broadcast %1 : f32 to vector<8x512xf32>
    %3 = arith.mulf %0, %2 : vector<8x512xf32>
    %c0_2 = arith.constant 0 : index
    %c0_3 = arith.constant 0 : index
    %4 = vector.load %arg3[%c0_2, %c0_3] : memref<8x512xf32, #tpu.memory_space<vmem>>, vector<8x512xf32>
    tpu.vector_store %arg3[%c0_2, %c0_3], %3 {strides = array<i32>} : memref<8x512xf32, #tpu.memory_space<vmem>>, vector<8x512xf32>,
    return
  }
  func.func @transform_0(%arg0: i32, %arg1: memref<1xf32, #tpu.memory_space<smem>>) -> (i32, i32) {
    %c0_i32 = arith.constant 0 : i32
    %c0_i32_0 = arith.constant 0 : i32
    return %arg0, %c0_i32 : i32, i32
  }
  func.func @transform_1(%arg0: i32, %arg1: memref<1xf32, #tpu.memory_space<smem>>) -> (i32, i32) {
    %c0_i32 = arith.constant 0 : i32
    %c0_i32_0 = arith.constant 0 : i32
    return %arg0, %c0_i32 : i32, i32
  }
}

</mosaic_0001>

<llo_original>
// kernel: tpu_custom_call.1
$region0: #{tpu_custom_call.1}
  #allocation0 [shape = 'u32[]', space=smem, size = 0x4, offset = 0x4, fixed_abs, tag = 'smem constant byte address 0x4 - core index']
  #allocation1 [shape = 'u32[144,128]{1,0:T(1,128)}', space=vmem, size = 0x12000, scoped, tag = 'internal scratch']
  #allocation2 [shape = 's32[1]{0}', space=sflag, size = 0x4, scoped, tag = 'scoped memory for tpu_custom_call.1']
  #allocation3 [shape = 'f32[1]{0:T(128)S(6)}', space=smem, size = 0x200, scoped, tag = 'prefetched SMEM operand 0']
  %s0 = inlined_call_operand.<no memory space> [shape: f32[1], index: 0, kind: input, shape index: {}]
  %s1 = inlined_call_operand.hbm [shape: f32[8,512], index: 1, kind: input, shape index: {}]
  %s2 = inlined_call_operand.hbm [shape: f32[8,512], index: 2, kind: output, shape index: {}]
  %s3 = sld [smem:[#allocation0]]
  $region18: #{tpu_custom_call.1} parent=0
    _
  %s5 = ssub.s32 1, %s3
  %s6 = scalar_select 0, %s5, %s3
  %7 = sst [smem:[#allocation3]] %s0
  $region1: #{tpu_custom_call.1} parent=0
    #allocation4 [shape = 'u8[16384]{0}', space=vmem, size = 0x4000, scoped, tag = 'input window, operand 1, single buffered']
    #allocation5 [shape = 's32[1]{0}', space=sflag, size = 0x4, scoped, tag = 'scoped memory for tpu_custom_call.1']
    #allocation6 [shape = 's32[1]{0}', space=sflag, size = 0x4, scoped, tag = 'scoped memory for tpu_custom_call.1']
    #allocation7 [shape = 'u8[16384]{0}', space=vmem, size = 0x4000, scoped, tag = 'output window, operand 0, single buffered']
    %8 = vsyncpa [#allocation5], 0
    %9 = vsyncpa [#allocation6], 0
    // Predicated region
    $region2: #{tpu_custom_call.1} parent=1 // pred_check
      _
    $region3: #{tpu_custom_call.1} parent=1 // pred_check_branch
      %11 = sbr.rel (0) target = $region5
    $region4: #{tpu_custom_call.1} parent=1 // pred_region
      %s13 = ssub.s32 512, 512
      %14 = vsyncadd [#allocation5], %s13
      %s16 = sshll.u32 [#allocation4], 4
      %s17 = int_to_ptr.vmem [resolvable:$true] %s16
      %19 = dma.hbm_to_vmem [thread:$0]  %s1, 512, %s17, [#allocation5]
    $region5: #{tpu_custom_call.1} parent=1 // pred_fallthru
      _
    // Predicated region
    $region6: #{tpu_custom_call.1} parent=1 // pred_check
      _
    $region7: #{tpu_custom_call.1} parent=1 // pred_check_branch
      %21 = sbr.rel (0) target = $region9
    $region8: #{tpu_custom_call.1} parent=1 // pred_region
      %22 = dma.done [#allocation5], 512
    $region9: #{tpu_custom_call.1} parent=1 // pred_fallthru
      _
    %v23 = vld [vmem:[#allocation4] sm:$0xff]
    %v24 = vld [vmem:[#allocation4 + $0x8] sm:$0xff]
    %v25 = vld [vmem:[#allocation4 + $0x10] sm:$0xff]
    %v26 = vld [vmem:[#allocation4 + $0x18] sm:$0xff]
    %s27 = sld [smem:[#allocation3]]
    %v28 = vstv %s27
    %v29 = vmul.f32 %v23, %v28
    %v30 = vmul.f32 %v24, %v28
    %v31 = vmul.f32 %v25, %v28
    %v32 = vmul.f32 %v26, %v28
    %33 = vst [vmem:[#allocation7] sm:$0xff] %v29
    %34 = vst [vmem:[#allocation7 + $0x8] sm:$0xff] %v30
    %35 = vst [vmem:[#allocation7 + $0x10] sm:$0xff] %v31
    %36 = vst [vmem:[#allocation7 + $0x18] sm:$0xff] %v32
    // Predicated region
    $region10: #{tpu_custom_call.1} parent=1 // pred_check
      _
    $region11: #{tpu_custom_call.1} parent=1 // pred_check_branch
      %38 = sbr.rel (0) target = $region13
    $region12: #{tpu_custom_call.1} parent=1 // pred_region
      %s40 = ssub.s32 512, 512
      %41 = vsyncadd [#allocation6], %s40
      %s43 = sshll.u32 [#allocation7], 4
      %s44 = int_to_ptr.vmem [resolvable:$true] %s43
      %46 = dma.vmem_to_hbm [thread:$0]  %s44, 512, %s2, [#allocation6]
    $region13: #{tpu_custom_call.1} parent=1 // pred_fallthru
      _
    // Predicated region
    $region14: #{tpu_custom_call.1} parent=1 // pred_check
      _
    $region15: #{tpu_custom_call.1} parent=1 // pred_check_branch
      %48 = sbr.rel (0) target = $region17
    $region16: #{tpu_custom_call.1} parent=1 // pred_region
      %49 = dma.done [#allocation6], 512
    $region17: #{tpu_custom_call.1} parent=1 // pred_fallthru
      _
    %50 = vsyncpa [#allocation5], 1
    %51 = vsyncpa [#allocation6], 1

</llo_original>
